<compile_context>
chip_gen: v7x
topology: tpu7x:2x2x1
jax: 0.10.0
libtpu: 0.0.40
codegen_flags: <defaults>
</compile_context>

<pallas_src>
import jax
import jax.numpy as jnp
from jax.experimental import pallas as pl
from jax.experimental.pallas import tpu as pltpu

_SUBLANE = 8
_TB_CAP = 2048  # max batch rows per grid step


def _cdiv(a, b):
    return -(-a // b)


def _round_up(x, m):
    return _cdiv(x, m) * m


def _mlp_kernel(y_ref, w1_ref, b1_ref, w2_ref, b2_ref, w3_ref, b3_ref, o_ref):
    """One batch tile of the 3-layer MLP; weights/biases VMEM-resident."""
    y = y_ref[...]  # (tb, y_dim) float32

    # Layer 1: (tb, y_dim) @ (y_dim, h) + (1, h) -> ReLU
    h1 = jnp.dot(y, w1_ref[...], preferred_element_type=jnp.float32) + b1_ref[...]
    h1 = jnp.maximum(h1, 0.0)

    # Layer 2: (tb, h) @ (h, h) + (1, h) -> ReLU
    h2 = jnp.dot(h1, w2_ref[...], preferred_element_type=jnp.float32) + b2_ref[...]
    h2 = jnp.maximum(h2, 0.0)

    # Layer 3: (tb, h) @ (h, y_dim) + (1, y_dim)
    out = jnp.dot(h2, w3_ref[...], preferred_element_type=jnp.float32) + b3_ref[...]
    o_ref[...] = out.astype(o_ref.dtype)


def vanilla_ode_func_forward(t, y, params):
    """Pallas forward. `t` is unused (exclude_time=True), kept for API parity."""
    del t  # exclude_time=True: the PyTorch forward ignores t entirely
    w1, b1, w2, b2, w3, b3 = params
    # Accept either (h,) PyTorch-style or (1, h) biases.
    b1 = jnp.reshape(b1, (1, -1))
    b2 = jnp.reshape(b2, (1, -1))
    b3 = jnp.reshape(b3, (1, -1))

    batch, y_dim = y.shape
    h_dim = w1.shape[1]

    # Split batch evenly over the fewest tiles of size <= _TB_CAP, rounded to
    # the sublane count, so the last tile is never mostly zero padding.
    n_tiles = max(1, _cdiv(batch, _TB_CAP))
    tb = _round_up(_cdiv(batch, n_tiles), _SUBLANE)
    batch_p = _round_up(batch, tb)
    grid = (batch_p // tb,)

    # Pad the batch dim only when necessary (no-op in the common aligned case).
    y_in = y if batch_p == batch else jnp.pad(y, ((0, batch_p - batch), (0, 0)))

    # Weights/biases: same block index every grid step -> stay VMEM-resident.
    resident = lambda shape: pl.BlockSpec(shape, lambda i: (0,) * len(shape))

    # Realistic (unpadded) cost estimate for the XLA scheduler.
    flops = 2 * batch * (y_dim * h_dim + h_dim * h_dim + h_dim * y_dim)
    bytes_accessed = 4 * (
        2 * batch * y_dim
        + w1.size + b1.size + w2.size + b2.size + w3.size + b3.size
    )

    out = pl.pallas_call(
        _mlp_kernel,
        out_shape=jax.ShapeDtypeStruct((batch_p, y_dim), y.dtype),
        grid_spec=pltpu.PrefetchScalarGridSpec(
            num_scalar_prefetch=0,
            grid=grid,
            in_specs=[
                pl.BlockSpec((tb, y_dim), lambda i: (i, 0)),   # y tile
                resident((y_dim, h_dim)), resident((1, h_dim)),  # W1, b1
                resident((h_dim, h_dim)), resident((1, h_dim)),  # W2, b2
                resident((h_dim, y_dim)), resident((1, y_dim)),  # W3, b3
            ],
            out_specs=pl.BlockSpec((tb, y_dim), lambda i: (i, 0)),
        ),
        compiler_params=pltpu.CompilerParams(
            dimension_semantics=("parallel",),
        ),
        cost_estimate=pl.CostEstimate(
            flops=flops, transcendentals=0, bytes_accessed=bytes_accessed,
        ),
    )(y_in, w1, b1, w2, b2, w3, b3)

    return out if batch_p == batch else out[:batch]


def init_params(key, y_dim, h_dim, exclude_time=True, t_dim=1):
    """Mirrors the PyTorch init: weights ~ N(0, 0.1), biases = 0.
    Weights stored as [in_dim, out_dim]."""
    inp_dim = y_dim if exclude_time else y_dim + t_dim
    k1, k2, k3 = jax.random.split(key, 3)
    w1 = 0.1 * jax.random.normal(k1, (inp_dim, h_dim), dtype=jnp.float32)
    b1 = jnp.zeros((1, h_dim), dtype=jnp.float32)
    w2 = 0.1 * jax.random.normal(k2, (h_dim, h_dim), dtype=jnp.float32)
    b2 = jnp.zeros((1, h_dim), dtype=jnp.float32)
    w3 = 0.1 * jax.random.normal(k3, (h_dim, y_dim), dtype=jnp.float32)
    b3 = jnp.zeros((1, y_dim), dtype=jnp.float32)
    return (w1, b1, w2, b2, w3, b3)


def reference_forward(t, y, params):
    """Pure-JAX reference of the same MLP for correctness checking."""
    del t
    w1, b1, w2, b2, w3, b3 = params
    h1 = jnp.maximum(y @ w1 + b1, 0.0)
    h2 = jnp.maximum(h1 @ w2 + b2, 0.0)
    return h2 @ w3 + b3


if __name__ == "__main__":
    key = jax.random.PRNGKey(0)
    k_param, k_y = jax.random.split(key)

    t_dim, h_dim, y_dim = 1, 32, 4
    batch = 8

    params = init_params(k_param, y_dim=y_dim, h_dim=h_dim,
                         exclude_time=True, t_dim=t_dim)
    y = jax.random.normal(k_y, (batch, y_dim), dtype=jnp.float32)
    t = jnp.zeros((), dtype=jnp.float32)  # ignored (exclude_time=True)

    out = vanilla_ode_func_forward(t, y, params)
    out = jax.block_until_ready(out)

    ref = reference_forward(t, y, params)
    assert out.shape == (batch, y_dim)
    assert jnp.allclose(out, ref, atol=1e-5, rtol=1e-5), \
        "Pallas output mismatch vs reference"

    print("KERNEL_OK")
</pallas_src>

<mosaic_0001>
module attributes {stable_mosaic.version = 11 : i64} {
  func.func @_mlp_kernel(%arg0: i32, %arg1: memref<8x4xf32, #tpu.memory_space<vmem>>, %arg2: memref<4x32xf32, #tpu.memory_space<vmem>>, %arg3: memref<1x32xf32, #tpu.memory_space<vmem>>, %arg4: memref<32x32xf32, #tpu.memory_space<vmem>>, %arg5: memref<1x32xf32, #tpu.memory_space<vmem>>, %arg6: memref<32x4xf32, #tpu.memory_space<vmem>>, %arg7: memref<1x4xf32, #tpu.memory_space<vmem>>, %arg8: memref<8x4xf32, #tpu.memory_space<vmem>>) attributes {dimension_semantics = [#tpu.dimension_semantics<parallel>], iteration_bounds = array<i64: 1>, scalar_prefetch = 0 : i64, scratch_operands = 0 : i64, tpu.core_type = #tpu.core_type<tc>, window_params = [{transform_indices = @transform_0, window_bounds = array<i64: 8, 4>}, {pipeline_mode = #tpu.pipeline_mode<synchronous>, transform_indices = @transform_1, window_bounds = array<i64: 4, 32>}, {pipeline_mode = #tpu.pipeline_mode<synchronous>, transform_indices = @transform_2, window_bounds = array<i64: 1, 32>}, {pipeline_mode = #tpu.pipeline_mode<synchronous>, transform_indices = @transform_3, window_bounds = array<i64: 32, 32>}, {pipeline_mode = #tpu.pipeline_mode<synchronous>, transform_indices = @transform_4, window_bounds = array<i64: 1, 32>}, {pipeline_mode = #tpu.pipeline_mode<synchronous>, transform_indices = @transform_5, window_bounds = array<i64: 32, 4>}, {pipeline_mode = #tpu.pipeline_mode<synchronous>, transform_indices = @transform_6, window_bounds = array<i64: 1, 4>}, {transform_indices = @transform_7, window_bounds = array<i64: 8, 4>}]} {
    %c0 = arith.constant 0 : index
    %c0_0 = arith.constant 0 : index
    %0 = vector.load %arg1[%c0, %c0_0] : memref<8x4xf32, #tpu.memory_space<vmem>>, vector<8x4xf32>
    %c0_1 = arith.constant 0 : index
    %c0_2 = arith.constant 0 : index
    %1 = vector.load %arg2[%c0_1, %c0_2] : memref<4x32xf32, #tpu.memory_space<vmem>>, vector<4x32xf32>
    %cst = arith.constant dense<0.000000e+00> : vector<8x32xf32>
    %2 = tpu.matmul %0, %1, %cst {dimension_numbers = #tpu.dot_dimension_numbers<[1], [0], [0], [1], [0, 0, 1, 1], [], []>} : vector<8x4xf32>, vector<4x32xf32>, vector<8x32xf32> -> vector<8x32xf32>
    %c0_3 = arith.constant 0 : index
    %c0_4 = arith.constant 0 : index
    %3 = vector.load %arg3[%c0_3, %c0_4] : memref<1x32xf32, #tpu.memory_space<vmem>>, vector<1x32xf32>
    %4 = vector.broadcast %3 : vector<1x32xf32> to vector<8x32xf32>
    %5 = arith.addf %2, %4 : vector<8x32xf32>
    %cst_5 = arith.constant 0.000000e+00 : f32
    %6 = vector.broadcast %cst_5 : f32 to vector<8x32xf32>
    %7 = arith.maximumf %5, %6 : vector<8x32xf32>
    %c0_6 = arith.constant 0 : index
    %c0_7 = arith.constant 0 : index
    %8 = vector.load %arg4[%c0_6, %c0_7] : memref<32x32xf32, #tpu.memory_space<vmem>>, vector<32x32xf32>
    %cst_8 = arith.constant dense<0.000000e+00> : vector<8x32xf32>
    %9 = tpu.matmul %7, %8, %cst_8 {dimension_numbers = #tpu.dot_dimension_numbers<[1], [0], [0], [1], [0, 0, 1, 1], [], []>} : vector<8x32xf32>, vector<32x32xf32>, vector<8x32xf32> -> vector<8x32xf32>
    %c0_9 = arith.constant 0 : index
    %c0_10 = arith.constant 0 : index
    %10 = vector.load %arg5[%c0_9, %c0_10] : memref<1x32xf32, #tpu.memory_space<vmem>>, vector<1x32xf32>
    %11 = vector.broadcast %10 : vector<1x32xf32> to vector<8x32xf32>
    %12 = arith.addf %9, %11 : vector<8x32xf32>
    %cst_11 = arith.constant 0.000000e+00 : f32
    %13 = vector.broadcast %cst_11 : f32 to vector<8x32xf32>
    %14 = arith.maximumf %12, %13 : vector<8x32xf32>
    %c0_12 = arith.constant 0 : index
    %c0_13 = arith.constant 0 : index
    %15 = vector.load %arg6[%c0_12, %c0_13] : memref<32x4xf32, #tpu.memory_space<vmem>>, vector<32x4xf32>
    %cst_14 = arith.constant dense<0.000000e+00> : vector<8x4xf32>
    %16 = tpu.matmul %14, %15, %cst_14 {dimension_numbers = #tpu.dot_dimension_numbers<[1], [0], [0], [1], [0, 0, 1, 1], [], []>} : vector<8x32xf32>, vector<32x4xf32>, vector<8x4xf32> -> vector<8x4xf32>
    %c0_15 = arith.constant 0 : index
    %c0_16 = arith.constant 0 : index
    %17 = vector.load %arg7[%c0_15, %c0_16] : memref<1x4xf32, #tpu.memory_space<vmem>>, vector<1x4xf32>
    %18 = vector.broadcast %17 : vector<1x4xf32> to vector<8x4xf32>
    %19 = arith.addf %16, %18 : vector<8x4xf32>
    %c0_17 = arith.constant 0 : index
    %c0_18 = arith.constant 0 : index
    %20 = vector.load %arg8[%c0_17, %c0_18] : memref<8x4xf32, #tpu.memory_space<vmem>>, vector<8x4xf32>
    tpu.vector_store %arg8[%c0_17, %c0_18], %19 {strides = array<i32>} : memref<8x4xf32, #tpu.memory_space<vmem>>, vector<8x4xf32>,
    return
  }
  func.func @transform_0(%arg0: i32) -> (i32, i32) {
    %c0_i32 = arith.constant 0 : i32
    %c0_i32_0 = arith.constant 0 : i32
    return %arg0, %c0_i32 : i32, i32
  }
  func.func @transform_1(%arg0: i32) -> (i32, i32) {
    %c0_i32 = arith.constant 0 : i32
    %c0_i32_0 = arith.constant 0 : i32
    %c0_i32_1 = arith.constant 0 : i32
    return %c0_i32, %c0_i32_0 : i32, i32
  }
  func.func @transform_2(%arg0: i32) -> (i32, i32) {
    %c0_i32 = arith.constant 0 : i32
    %c0_i32_0 = arith.constant 0 : i32
    %c0_i32_1 = arith.constant 0 : i32
    return %c0_i32, %c0_i32_0 : i32, i32
  }
  func.func @transform_3(%arg0: i32) -> (i32, i32) {
    %c0_i32 = arith.constant 0 : i32
    %c0_i32_0 = arith.constant 0 : i32
    %c0_i32_1 = arith.constant 0 : i32
    return %c0_i32, %c0_i32_0 : i32, i32
  }
  func.func @transform_4(%arg0: i32) -> (i32, i32) {
    %c0_i32 = arith.constant 0 : i32
    %c0_i32_0 = arith.constant 0 : i32
    %c0_i32_1 = arith.constant 0 : i32
    return %c0_i32, %c0_i32_0 : i32, i32
  }
  func.func @transform_5(%arg0: i32) -> (i32, i32) {
    %c0_i32 = arith.constant 0 : i32
    %c0_i32_0 = arith.constant 0 : i32
    %c0_i32_1 = arith.constant 0 : i32
    return %c0_i32, %c0_i32_0 : i32, i32
  }
  func.func @transform_6(%arg0: i32) -> (i32, i32) {
    %c0_i32 = arith.constant 0 : i32
    %c0_i32_0 = arith.constant 0 : i32
    %c0_i32_1 = arith.constant 0 : i32
    return %c0_i32, %c0_i32_0 : i32, i32
  }
  func.func @transform_7(%arg0: i32) -> (i32, i32) {
    %c0_i32 = arith.constant 0 : i32
    %c0_i32_0 = arith.constant 0 : i32
    return %arg0, %c0_i32 : i32, i32
  }
}

</mosaic_0001>

<llo_original>
// kernel: tpu_custom_call.1
$region0: #{tpu_custom_call.1}
  #allocation0 [shape = 'u32[]', space=smem, size = 0x4, offset = 0x4, fixed_abs, tag = 'smem constant byte address 0x4 - core index']
  #allocation1 [shape = 'u32[144,128]{1,0:T(1,128)}', space=vmem, size = 0x12000, scoped, tag = 'internal scratch']
  %s0 = inlined_call_operand.vmem [shape: f32[8,4], index: 0, kind: input, shape index: {}]
  %s1 = inlined_call_operand.vmem [shape: f32[4,32], index: 1, kind: input, shape index: {}]
  %s2 = inlined_call_operand.vmem [shape: f32[1,32], index: 2, kind: input, shape index: {}]
  %s3 = inlined_call_operand.vmem [shape: f32[32,32], index: 3, kind: input, shape index: {}]
  %s4 = inlined_call_operand.vmem [shape: f32[1,32], index: 4, kind: input, shape index: {}]
  %s5 = inlined_call_operand.vmem [shape: f32[32,4], index: 5, kind: input, shape index: {}]
  %s6 = inlined_call_operand.vmem [shape: f32[1,4], index: 6, kind: input, shape index: {}]
  %s7 = inlined_call_operand.vmem [shape: f32[8,4], index: 7, kind: output, shape index: {}]
  %s8 = sld [smem:[#allocation0]]
  $region38: #{tpu_custom_call.1} parent=0
    _
  %s10 = ssub.s32 1, %s8
  %s11 = scalar_select 0, %s10, %s8
  // Predicated region
  $region2: #{tpu_custom_call.1} parent=0 // pred_check
    _
  $region3: #{tpu_custom_call.1} parent=0 // pred_check_branch
    %13 = sbr.rel (0) target = $region5
  $region4: #{tpu_custom_call.1} parent=0 // pred_region
    _
  $region5: #{tpu_custom_call.1} parent=0 // pred_fallthru
    _
  // Predicated region
  $region6: #{tpu_custom_call.1} parent=0 // pred_check
    _
  $region7: #{tpu_custom_call.1} parent=0 // pred_check_branch
    %15 = sbr.rel (0) target = $region9
  $region8: #{tpu_custom_call.1} parent=0 // pred_region
    _
  $region9: #{tpu_custom_call.1} parent=0 // pred_fallthru
    _
  // Predicated region
  $region10: #{tpu_custom_call.1} parent=0 // pred_check
    _
  $region11: #{tpu_custom_call.1} parent=0 // pred_check_branch
    %17 = sbr.rel (0) target = $region13
  $region12: #{tpu_custom_call.1} parent=0 // pred_region
    _
  $region13: #{tpu_custom_call.1} parent=0 // pred_fallthru
    _
  // Predicated region
  $region14: #{tpu_custom_call.1} parent=0 // pred_check
    _
  $region15: #{tpu_custom_call.1} parent=0 // pred_check_branch
    %19 = sbr.rel (0) target = $region17
  $region16: #{tpu_custom_call.1} parent=0 // pred_region
    _
  $region17: #{tpu_custom_call.1} parent=0 // pred_fallthru
    _
  // Predicated region
  $region18: #{tpu_custom_call.1} parent=0 // pred_check
    _
  $region19: #{tpu_custom_call.1} parent=0 // pred_check_branch
    %21 = sbr.rel (0) target = $region21
  $region20: #{tpu_custom_call.1} parent=0 // pred_region
    _
  $region21: #{tpu_custom_call.1} parent=0 // pred_fallthru
    _
  // Predicated region
  $region22: #{tpu_custom_call.1} parent=0 // pred_check
    _
  $region23: #{tpu_custom_call.1} parent=0 // pred_check_branch
    %23 = sbr.rel (0) target = $region25
  $region24: #{tpu_custom_call.1} parent=0 // pred_region
    _
  $region25: #{tpu_custom_call.1} parent=0 // pred_fallthru
    _
  // Predicated region
  $region26: #{tpu_custom_call.1} parent=0 // pred_check
    _
  $region27: #{tpu_custom_call.1} parent=0 // pred_check_branch
    %25 = sbr.rel (0) target = $region29
  $region28: #{tpu_custom_call.1} parent=0 // pred_region
    _
  $region29: #{tpu_custom_call.1} parent=0 // pred_fallthru
    _
  %v26 = vld [vmem:[%s0] sm:$0xff]
  %v27 = vld [vmem:[%s1] sm:$0xf]
  %v28 = vld [vmem:[%s2] sm:$0x1]
  %v30 = vlaneseq
  %v31 = vshrl.u32 %v30, 7
  %v32 = vsub.s32 0, %v31
  %v33 = vrot.slane %v28, %v32
  %vm35 = vcmask 31744
  %v37 = vsel %vm35, %v26, 0
  %vm39 = vcmask 1043456
  %v41 = vsel %vm39, %v27, 0
  %43 = vmatprep.subr.mxu0 0.0
  %44 = vmatpush1.msra.mxu0 %v41
  %45 = vmatprep.subr.mxu0 0.0
  %46 = vmatpush1.msra.mxu0 0.0
  %47 = vmatprep.subr.mxu0 0.0
  %48 = vmatpush1.msra.mxu0 0.0
  %49 = vmatprep.subr.mxu0 0.0
  %50 = vmatpush1.msra.mxu0 0.0
  %51 = vmatprep.subr.mxu0 0.0
  %52 = vmatpush1.msra.mxu0 0.0
  %53 = vmatprep.subr.mxu0 0.0
  %54 = vmatpush1.msra.mxu0 0.0
  %55 = vmatprep.subr.mxu0 0.0
  %56 = vmatpush1.msra.mxu0 0.0
  %57 = vmatprep.subr.mxu0 0.0
  %58 = vmatpush1.msra.mxu0 0.0
  %59 = vmatprep.subr.mxu0 0.0
  %60 = vmatpush1.msra.mxu0 0.0
  %61 = vmatprep.subr.mxu0 0.0
  %62 = vmatpush1.msra.mxu0 0.0
  %63 = vmatprep.subr.mxu0 0.0
  %64 = vmatpush1.msra.mxu0 0.0
  %65 = vmatprep.subr.mxu0 0.0
  %66 = vmatpush1.msra.mxu0 0.0
  %67 = vmatprep.subr.mxu0 0.0
  %68 = vmatpush1.msra.mxu0 0.0
  %69 = vmatprep.subr.mxu0 0.0
  %70 = vmatpush1.msra.mxu0 0.0
  %71 = vmatprep.subr.mxu0 0.0
  %72 = vmatpush1.msra.mxu0 0.0
  %73 = vmatprep.subr.mxu0 0.0
  %74 = vmatpush1.msra.mxu0 0.0
  %75 = vmatprep.subr.mxu0 0.0
  %76 = vmatpush1.msra.mxu0 0.0
  %77 = vmatprep.subr.mxu0 0.0
  %78 = vmatpush1.msra.mxu0 0.0
  %79 = vmatprep.subr.mxu0 0.0
  %80 = vmatpush1.msra.mxu0 0.0
  %81 = vmatprep.subr.mxu0 0.0
  %82 = vmatpush1.msra.mxu0 0.0
  %83 = vmatprep.subr.mxu0 0.0
  %84 = vmatpush1.msra.mxu0 0.0
  %85 = vmatprep.subr.mxu0 0.0
  %86 = vmatpush1.msra.mxu0 0.0
  %87 = vmatprep.subr.mxu0 0.0
  %88 = vmatpush1.msra.mxu0 0.0
  %89 = vmatprep.subr.mxu0 0.0
  %90 = vmatpush1.msra.mxu0 0.0
  %91 = vmatprep.subr.mxu0 0.0
  %92 = vmatpush1.msra.mxu0 0.0
  %93 = vmatprep.subr.mxu0 0.0
  %94 = vmatpush1.msra.mxu0 0.0
  %95 = vmatprep.subr.mxu0 0.0
  %96 = vmatpush1.msra.mxu0 0.0
  %97 = vmatprep.subr.mxu0 0.0
  %98 = vmatpush1.msra.mxu0 0.0
  %99 = vmatprep.subr.mxu0 0.0
  %100 = vmatpush1.msra.mxu0 0.0
  %101 = vmatprep.subr.mxu0 0.0
  %102 = vmatpush1.msra.mxu0 0.0
  %103 = vmatprep.subr.mxu0 0.0
  %104 = vmatpush1.msra.mxu0 0.0
  %105 = vmatprep.subr.mxu0 0.0
  %106 = vmatpush1.msra.mxu0 0.0
  %107 = vmatprep.mubr.f32.mxu0 0.0
  %108 = vmatmul.mubr.f32.gmra.mrb[0].mxu0 %v37
  %v109 = vpop.f32.mrb[0].mxu0
  %v110 = vadd.f32 %v33, %v109
  %v111 = vpop.f32.mrb[0].mxu0
  %112 = vdwg.mxu0
  %v113 = vmax.f32 %v110, 0.0
  %v114 = vld [vmem:[%s3] sm:$0xff]
  %v115 = vld [vmem:[%s3 + $0x8] sm:$0xff]
  %v116 = vld [vmem:[%s3 + $0x10] sm:$0xff]
  %v117 = vld [vmem:[%s3 + $0x18] sm:$0xff]
  %v118 = vld [vmem:[%s4] sm:$0x1]
  %v120 = vlaneseq
  %v121 = vshrl.u32 %v120, 7
  %v122 = vsub.s32 0, %v121
  %v123 = vrot.slane %v118, %v122
  %vm125 = vcmask 261120
  %v127 = vsel %vm125, %v113, 0
  %129 = vmatprep.subr.mxu0 0.0
  %130 = vmatpush1.msra.mxu0 %v114
  %131 = vmatprep.subr.mxu0 0.0
  %132 = vmatpush1.msra.mxu0 %v115
  %133 = vmatprep.subr.mxu0 0.0
  %134 = vmatpush1.msra.mxu0 %v116
  %135 = vmatprep.subr.mxu0 0.0
  %136 = vmatpush1.msra.mxu0 %v117
  %137 = vmatprep.subr.mxu0 0.0
  %138 = vmatpush1.msra.mxu0 0.0
  %139 = vmatprep.subr.mxu0 0.0
  %140 = vmatpush1.msra.mxu0 0.0
  %141 = vmatprep.subr.mxu0 0.0
  %142 = vmatpush1.msra.mxu0 0.0
  %143 = vmatprep.subr.mxu0 0.0
  %144 = vmatpush1.msra.mxu0 0.0
  %145 = vmatprep.subr.mxu0 0.0
  %146 = vmatpush1.msra.mxu0 0.0
  %147 = vmatprep.subr.mxu0 0.0
  %148 = vmatpush1.msra.mxu0 0.0
  %149 = vmatprep.subr.mxu0 0.0
  %150 = vmatpush1.msra.mxu0 0.0
  %151 = vmatprep.subr.mxu0 0.0
  %152 = vmatpush1.msra.mxu0 0.0
  %153 = vmatprep.subr.mxu0 0.0
  %154 = vmatpush1.msra.mxu0 0.0
  %155 = vmatprep.subr.mxu0 0.0
  %156 = vmatpush1.msra.mxu0 0.0
  %157 = vmatprep.subr.mxu0 0.0
  %158 = vmatpush1.msra.mxu0 0.0
  %159 = vmatprep.subr.mxu0 0.0
  %160 = vmatpush1.msra.mxu0 0.0
  %161 = vmatprep.subr.mxu0 0.0
  %162 = vmatpush1.msra.mxu0 0.0
  %163 = vmatprep.subr.mxu0 0.0
  %164 = vmatpush1.msra.mxu0 0.0
  %165 = vmatprep.subr.mxu0 0.0
  %166 = vmatpush1.msra.mxu0 0.0
  %167 = vmatprep.subr.mxu0 0.0
  %168 = vmatpush1.msra.mxu0 0.0
  %169 = vmatprep.subr.mxu0 0.0
  %170 = vmatpush1.msra.mxu0 0.0
  %171 = vmatprep.subr.mxu0 0.0
  %172 = vmatpush1.msra.mxu0 0.0
  %173 = vmatprep.subr.mxu0 0.0
  %174 = vmatpush1.msra.mxu0 0.0
  %175 = vmatprep.subr.mxu0 0.0
  %176 = vmatpush1.msra.mxu0 0.0
  %177 = vmatprep.subr.mxu0 0.0
  %178 = vmatpush1.msra.mxu0 0.0
  %179 = vmatprep.subr.mxu0 0.0
  %180 = vmatpush1.msra.mxu0 0.0
  %181 = vmatprep.subr.mxu0 0.0
  %182 = vmatpush1.msra.mxu0 0.0
  %183 = vmatprep.subr.mxu0 0.0
  %184 = vmatpush1.msra.mxu0 0.0
  %185 = vmatprep.subr.mxu0 0.0
  %186 = vmatpush1.msra.mxu0 0.0
  %187 = vmatprep.subr.mxu0 0.0
  %188 = vmatpush1.msra.mxu0 0.0
  %189 = vmatprep.subr.mxu0 0.0
  %190 = vmatpush1.msra.mxu0 0.0
  %191 = vmatprep.subr.mxu0 0.0
  %192 = vmatpush1.msra.mxu0 0.0
  %193 = vmatprep.mubr.f32.mxu0 0.0
  %194 = vmatmul.mubr.f32.gmra.mrb[0].mxu0 %v127
  %v195 = vpop.f32.mrb[0].mxu0
  %v196 = vadd.f32 %v123, %v195
  %v197 = vpop.f32.mrb[0].mxu0
  %198 = vdwg.mxu0
  %v199 = vmax.f32 %v196, 0.0
  %v200 = vld [vmem:[%s5] sm:$0xff]
  %v201 = vld [vmem:[%s5 + $0x8] sm:$0xff]
  %v202 = vld [vmem:[%s5 + $0x10] sm:$0xff]
  %v203 = vld [vmem:[%s5 + $0x18] sm:$0xff]
  %v204 = vld [vmem:[%s6] sm:$0x1]
  %v206 = vlaneseq
  %v207 = vshrl.u32 %v206, 7
  %v208 = vsub.s32 0, %v207
  %v209 = vrot.slane %v204, %v208
  %v212 = vsel %vm125, %v199, 0
  %214 = vmatprep.subr.mxu0 0.0
  %215 = vmatpush1.msra.mxu0 %v200
  %216 = vmatprep.subr.mxu0 0.0
  %217 = vmatpush1.msra.mxu0 %v201
  %218 = vmatprep.subr.mxu0 0.0
  %219 = vmatpush1.msra.mxu0 %v202
  %220 = vmatprep.subr.mxu0 0.0
  %221 = vmatpush1.msra.mxu0 %v203
  %222 = vmatprep.subr.mxu0 0.0
  %223 = vmatpush1.msra.mxu0 0.0
  %224 = vmatprep.subr.mxu0 0.0
  %225 = vmatpush1.msra.mxu0 0.0
  %226 = vmatprep.subr.mxu0 0.0
  %227 = vmatpush1.msra.mxu0 0.0
  %228 = vmatprep.subr.mxu0 0.0
  %229 = vmatpush1.msra.mxu0 0.0
  %230 = vmatprep.subr.mxu0 0.0
  %231 = vmatpush1.msra.mxu0 0.0
  %232 = vmatprep.subr.mxu0 0.0
  %233 = vmatpush1.msra.mxu0 0.0
  %234 = vmatprep.subr.mxu0 0.0
  %235 = vmatpush1.msra.mxu0 0.0
  %236 = vmatprep.subr.mxu0 0.0
  %237 = vmatpush1.msra.mxu0 0.0
  %238 = vmatprep.subr.mxu0 0.0
  %239 = vmatpush1.msra.mxu0 0.0
  %240 = vmatprep.subr.mxu0 0.0
  %241 = vmatpush1.msra.mxu0 0.0
  %242 = vmatprep.subr.mxu0 0.0
  %243 = vmatpush1.msra.mxu0 0.0
  %244 = vmatprep.subr.mxu0 0.0
  %245 = vmatpush1.msra.mxu0 0.0
  %246 = vmatprep.subr.mxu0 0.0
  %247 = vmatpush1.msra.mxu0 0.0
  %248 = vmatprep.subr.mxu0 0.0
  %249 = vmatpush1.msra.mxu0 0.0
  %250 = vmatprep.subr.mxu0 0.0
  %251 = vmatpush1.msra.mxu0 0.0
  %252 = vmatprep.subr.mxu0 0.0
  %253 = vmatpush1.msra.mxu0 0.0
  %254 = vmatprep.subr.mxu0 0.0
  %255 = vmatpush1.msra.mxu0 0.0
  %256 = vmatprep.subr.mxu0 0.0
  %257 = vmatpush1.msra.mxu0 0.0
  %258 = vmatprep.subr.mxu0 0.0
  %259 = vmatpush1.msra.mxu0 0.0
  %260 = vmatprep.subr.mxu0 0.0
  %261 = vmatpush1.msra.mxu0 0.0
  %262 = vmatprep.subr.mxu0 0.0
  %263 = vmatpush1.msra.mxu0 0.0
  %264 = vmatprep.subr.mxu0 0.0
  %265 = vmatpush1.msra.mxu0 0.0
  %266 = vmatprep.subr.mxu0 0.0
  %267 = vmatpush1.msra.mxu0 0.0
  %268 = vmatprep.subr.mxu0 0.0
  %269 = vmatpush1.msra.mxu0 0.0
  %270 = vmatprep.subr.mxu0 0.0
  %271 = vmatpush1.msra.mxu0 0.0
  %272 = vmatprep.subr.mxu0 0.0
  %273 = vmatpush1.msra.mxu0 0.0
  %274 = vmatprep.subr.mxu0 0.0
  %275 = vmatpush1.msra.mxu0 0.0
  %276 = vmatprep.subr.mxu0 0.0
  %277 = vmatpush1.msra.mxu0 0.0
  %278 = vmatprep.mubr.f32.mxu0 0.0
  %279 = vmatmul.mubr.f32.gmra.mrb[0].mxu0 %v212
  %v280 = vpop.f32.mrb[0].mxu0
  %v281 = vadd.f32 %v209, %v280
  %v282 = vpop.f32.mrb[0].mxu0
  %283 = vdwg.mxu0
  %284 = vst.msk [vmem:[%s7] sm:$0xff] %vm35, %v281
  // Predicated region
  $region30: #{tpu_custom_call.1} parent=0 // pred_check
    _
  $region31: #{tpu_custom_call.1} parent=0 // pred_check_branch
    %286 = sbr.rel (0) target = $region33
  $region32: #{tpu_custom_call.1} parent=0 // pred_region
    _
  $region33: #{tpu_custom_call.1} parent=0 // pred_fallthru
    _
  // Predicated region
  $region34: #{tpu_custom_call.1} parent=0 // pred_check
    _
  $region35: #{tpu_custom_call.1} parent=0 // pred_check_branch
    %288 = sbr.rel (0) target = $region37
  $region36: #{tpu_custom_call.1} parent=0 // pred_region
    _
  $region37: #{tpu_custom_call.1} parent=0 // pred_fallthru
    _

</llo_original>
